<compile_context>
chip_gen: v7x
topology: tpu7x:2x2x1
jax: 0.10.0
libtpu: 0.0.40
codegen_flags: <defaults>
</compile_context>

<pallas_src>
import functools

import jax
import jax.numpy as jnp
from jax import lax
from jax.experimental import pallas as pl
from jax.experimental.pallas import tpu as pltpu


_TILE_BLOCK_BYTES = 4 * 1024 * 1024    # target bytes per row block (native dtype)
_FUSED_FRACTION = 0.70                 # fraction of VMEM usable by the fused sweep
_VMEM_LIMIT_CAP = 100 * 1024 * 1024    # never request more than ~100 MiB scoped VMEM
_VMEM_HEADROOM = 8 * 1024 * 1024


@functools.lru_cache(maxsize=1)
def _vmem_capacity_bytes():
    """Physical VMEM of the attached TPU (conservative fallback if unknown)."""
    try:
        return int(pltpu.get_tpu_info().vmem_capacity_bytes)
    except Exception:
        return 64 * 1024 * 1024        # v7x-sized fallback: safe everywhere


def _vmem_limit_bytes():
    cap = _vmem_capacity_bytes()
    return int(min(cap - _VMEM_HEADROOM, _VMEM_LIMIT_CAP))


def _compiler_params(semantics):
    return pltpu.CompilerParams(
        dimension_semantics=semantics,
        vmem_limit_bytes=_vmem_limit_bytes(),
    )


def _buffered_spec(block_shape, index_map, buffer_count):
    """BlockSpec with an explicit pipeline buffer count (graceful fallback)."""
    try:
        return pl.BlockSpec(block_shape, index_map,
                            pipeline_mode=pl.Buffered(buffer_count=buffer_count))
    except Exception:
        return pl.BlockSpec(block_shape, index_map)


# --------------------------------------------------------------------------
# Fused single-sweep kernel: whole (rows, H) array resident in VMEM.
# Centered variance formula (no cancellation issue).
# --------------------------------------------------------------------------
def _fused_bn_kernel(x_ref, gamma_ref, beta_ref, o_ref, *, eps, rows):
    x = x_ref[...].astype(jnp.float32)                       # (rows, H)
    inv_n = 1.0 / float(rows)
    mean = jnp.sum(x, axis=0, keepdims=True) * inv_n          # (1, H)
    xc = x - mean
    var = jnp.sum(xc * xc, axis=0, keepdims=True) * inv_n     # biased var
    scale = gamma_ref[...].astype(jnp.float32) * lax.rsqrt(var + eps)
    shift = beta_ref[...].astype(jnp.float32)
    o_ref[...] = (xc * scale + shift).astype(o_ref.dtype)


# --------------------------------------------------------------------------
# Tiled path, pass 1: per-block partial sum / sum-of-squares.
# No carried accumulator -> row-block axis is "parallel" (megacore on v7x).
# --------------------------------------------------------------------------
def _stats_kernel(x_ref, sum_ref, sumsq_ref, *, block_rows, valid_rows, needs_mask):
    x = x_ref[...].astype(jnp.float32)                        # (block_rows, H)
    if needs_mask:                                            # static: ragged only
        r = pl.program_id(0)
        row_ids = r * block_rows + lax.broadcasted_iota(jnp.int32, x.shape, 0)
        x = jnp.where(row_ids < valid_rows, x, 0.0)
    sum_ref[...] = jnp.sum(x, axis=0, keepdims=True)[None]      # (1, 1, H)
    sumsq_ref[...] = jnp.sum(x * x, axis=0, keepdims=True)[None]


# --------------------------------------------------------------------------
# Tiled path, pass 2: y = x * scale + shift (per-feature scale/shift).
# --------------------------------------------------------------------------
def _apply_kernel(x_ref, scale_ref, shift_ref, o_ref):
    x = x_ref[...].astype(jnp.float32)
    o_ref[...] = (x * scale_ref[...] + shift_ref[...]).astype(o_ref.dtype)


@functools.partial(jax.jit, static_argnames=("eps", "force_tiled", "max_block_rows"))
def sequence_wise_batch_norm(x, gamma, beta, eps=1e-5, force_tiled=False,
                             max_block_rows=None):
    """SequenceWise(BatchNorm1d(H)) forward.  x: (T, N, H); gamma/beta: (H,)."""
    t, n, h = x.shape
    rows = t * n
    itemsize = jnp.dtype(x.dtype).itemsize

    # ---- lane folding for narrow feature dims (H < 128) -------------------
    k = 1
    if h < 128 and 128 % h == 0:
        kk = 128 // h
        if rows % kk == 0:
            k = kk
    rows_eff = rows // k
    h_eff = h * k

    x2 = x.reshape(rows_eff, h_eff)       # contiguous "SequenceWise view" (+ fold)
    gamma32 = gamma.astype(jnp.float32).reshape(1, h)
    beta32 = beta.astype(jnp.float32).reshape(1, h)

    # ---- fused single-sweep path (1 HBM read + 1 HBM write) ---------------
    # Working set estimate: in+out blocks (conservatively assume they might
    # still be double-buffered) plus ~3 f32 temporaries inside the kernel.
    vmem_cap = _vmem_capacity_bytes()
    fused_bytes = rows_eff * h_eff * (4 * itemsize + 12)
    use_fused = (not force_tiled) and k == 1 and \
        fused_bytes <= int(_FUSED_FRACTION * vmem_cap)

    if use_fused:
        out2 = pl.pallas_call(
            functools.partial(_fused_bn_kernel, eps=eps, rows=rows),
            out_shape=jax.ShapeDtypeStruct((rows_eff, h_eff), x.dtype),
            grid_spec=pltpu.PrefetchScalarGridSpec(
                num_scalar_prefetch=0,
                grid=(1,),
                in_specs=[
                    _buffered_spec((rows_eff, h_eff), lambda i: (0, 0), 1),
                    pl.BlockSpec((1, h), lambda i: (0, 0)),
                    pl.BlockSpec((1, h), lambda i: (0, 0)),
                ],
                out_specs=_buffered_spec((rows_eff, h_eff), lambda i: (0, 0), 1),
            ),
            compiler_params=_compiler_params(("arbitrary",)),
        )(x2, gamma32, beta32)
        return out2.reshape(t, n, h)

    # ---- tiled two-pass path ----------------------------------------------
    pack = 8 * max(1, 4 // itemsize)      # sublane packing: 8 f32 / 16 bf16
    budget_rows = max(pack, (_TILE_BLOCK_BYTES // (h_eff * itemsize)) // pack * pack)
    if max_block_rows is not None:        # testing hook
        budget_rows = max(pack, (max_block_rows // pack) * pack)
    block_rows = rows_eff if budget_rows >= rows_eff else budget_rows
    grid_r = pl.cdiv(rows_eff, block_rows)
    needs_mask = (rows_eff % block_rows) != 0

    # Pass 1: per-block partial sums / sums of squares.
    ps, pss = pl.pallas_call(
        functools.partial(_stats_kernel, block_rows=block_rows,
                          valid_rows=rows_eff, needs_mask=needs_mask),
        out_shape=(
            jax.ShapeDtypeStruct((grid_r, 1, h_eff), jnp.float32),
            jax.ShapeDtypeStruct((grid_r, 1, h_eff), jnp.float32),
        ),
        grid_spec=pltpu.PrefetchScalarGridSpec(
            num_scalar_prefetch=0,
            grid=(grid_r,),
            in_specs=[pl.BlockSpec((block_rows, h_eff), lambda r: (r, 0))],
            out_specs=(
                pl.BlockSpec((1, 1, h_eff), lambda r: (r, 0, 0)),
                pl.BlockSpec((1, 1, h_eff), lambda r: (r, 0, 0)),
            ),
        ),
        compiler_params=_compiler_params(("parallel",)),
    )(x2)

    # Tiny O(grid_r * H) finalization in plain JAX (also un-folds lane groups).
    s_tot = ps.reshape(grid_r * k, h).sum(axis=0)              # (H,)
    ss_tot = pss.reshape(grid_r * k, h).sum(axis=0)
    inv_n = 1.0 / float(rows)
    mean = s_tot * inv_n
    var = jnp.maximum(ss_tot * inv_n - mean * mean, 0.0)       # clamp cancellation
    scale = gamma32[0] * lax.rsqrt(var + eps)
    shift = beta32[0] - mean * scale
    scale_f = jnp.tile(scale.reshape(1, h), (1, k))            # (1, k*H)
    shift_f = jnp.tile(shift.reshape(1, h), (1, k))

    # Pass 2: normalize.
    out2 = pl.pallas_call(
        _apply_kernel,
        out_shape=jax.ShapeDtypeStruct((rows_eff, h_eff), x.dtype),
        grid_spec=pltpu.PrefetchScalarGridSpec(
            num_scalar_prefetch=0,
            grid=(grid_r,),
            in_specs=[
                pl.BlockSpec((block_rows, h_eff), lambda r: (r, 0)),
                pl.BlockSpec((1, h_eff), lambda r: (0, 0)),
                pl.BlockSpec((1, h_eff), lambda r: (0, 0)),
            ],
            out_specs=pl.BlockSpec((block_rows, h_eff), lambda r: (r, 0)),
        ),
        compiler_params=_compiler_params(("parallel",)),
    )(x2, scale_f, shift_f)
    return out2.reshape(t, n, h)


def _reference(x, gamma, beta, eps=1e-5):
    t, n, h = x.shape
    x2 = x.reshape(t * n, h).astype(jnp.float32)
    mean = jnp.mean(x2, axis=0, keepdims=True)
    var = jnp.mean((x2 - mean) ** 2, axis=0, keepdims=True)    # biased
    y = (x2 - mean) / jnp.sqrt(var + eps) * gamma.astype(jnp.float32) + beta
    return y.reshape(t, n, h).astype(x.dtype)


if __name__ == "__main__":
    def run_case(t, n, h, dtype, seed, **kw):
        kx, kg, kb = jax.random.split(jax.random.PRNGKey(seed), 3)
        x = jax.random.normal(kx, (t, n, h), dtype=jnp.float32).astype(dtype)
        gamma = 1.0 + 0.1 * jax.random.normal(kg, (h,), dtype=jnp.float32)
        beta = 0.1 * jax.random.normal(kb, (h,), dtype=jnp.float32)
        out = sequence_wise_batch_norm(x, gamma, beta, **kw)
        out = jax.block_until_ready(out)
        ref = _reference(x, gamma, beta)
        assert out.shape == (t, n, h)
        tol = 1e-4 if dtype == jnp.float32 else 5e-2
        assert jnp.allclose(out.astype(jnp.float32), ref.astype(jnp.float32),
                            atol=tol, rtol=tol), ("mismatch", t, n, h, dtype)

    # 1) Small (T, N, H) = (8, 2, 32): H < 128 -> lane-folded (rows/4, 128) path.
    run_case(8, 2, 32, jnp.float32, 0)
    # 2) Lane-dense H=128 forced onto the multi-block tiled path (ragged blocks).
    run_case(128, 8, 128, jnp.float32, 0, force_tiled=True, max_block_rows=384)
    # 3) Narrow H with several row blocks: folding + ragged last block + row mask.
    run_case(64, 8, 32, jnp.float32, 1, force_tiled=True, max_block_rows=48)
    # 4) Fused single-sweep path with bf16 activations (dtype-aware budget).
    run_case(16, 4, 128, jnp.bfloat16, 2)
    # 5) Fused single-sweep path with f32 activations.
    run_case(32, 4, 256, jnp.float32, 3)

    print("KERNEL_OK")
</pallas_src>

<mosaic_0001>
module attributes {stable_mosaic.version = 11 : i64} {
  func.func @_stats_kernel(%arg0: i32, %arg1: memref<4x128xf32, #tpu.memory_space<vmem>>, %arg2: memref<1x1x128xf32, #tpu.memory_space<vmem>>, %arg3: memref<1x1x128xf32, #tpu.memory_space<vmem>>) attributes {dimension_semantics = [#tpu.dimension_semantics<parallel>], iteration_bounds = array<i64: 1>, scalar_prefetch = 0 : i64, scratch_operands = 0 : i64, tpu.core_type = #tpu.core_type<tc>, window_params = [{transform_indices = @transform_0, window_bounds = array<i64: 4, 128>}, {transform_indices = @transform_1, window_bounds = array<i64: 1, 1, 128>}, {transform_indices = @transform_2, window_bounds = array<i64: 1, 1, 128>}]} {
    %c0 = arith.constant 0 : index
    %c0_0 = arith.constant 0 : index
    %0 = vector.load %arg1[%c0, %c0_0] : memref<4x128xf32, #tpu.memory_space<vmem>>, vector<4x128xf32>
    %cst = arith.constant dense<0.000000e+00> : vector<128xf32>
    %1 = vector.multi_reduction <add>, %0, %cst [0] : vector<4x128xf32> to vector<128xf32>
    %2 = vector.shape_cast %1 : vector<128xf32> to vector<1x128xf32>
    %3 = vector.shape_cast %2 : vector<1x128xf32> to vector<1x1x128xf32>
    %c0_1 = arith.constant 0 : index
    %c0_2 = arith.constant 0 : index
    %c0_3 = arith.constant 0 : index
    %4 = vector.load %arg2[%c0_1, %c0_2, %c0_3] : memref<1x1x128xf32, #tpu.memory_space<vmem>>, vector<1x1x128xf32>
    tpu.vector_store %arg2[%c0_1, %c0_2, %c0_3], %3 {strides = array<i32>} : memref<1x1x128xf32, #tpu.memory_space<vmem>>, vector<1x1x128xf32>,
    %5 = arith.mulf %0, %0 : vector<4x128xf32>
    %cst_4 = arith.constant dense<0.000000e+00> : vector<128xf32>
    %6 = vector.multi_reduction <add>, %5, %cst_4 [0] : vector<4x128xf32> to vector<128xf32>
    %7 = vector.shape_cast %6 : vector<128xf32> to vector<1x128xf32>
    %8 = vector.shape_cast %7 : vector<1x128xf32> to vector<1x1x128xf32>
    %c0_5 = arith.constant 0 : index
    %c0_6 = arith.constant 0 : index
    %c0_7 = arith.constant 0 : index
    %9 = vector.load %arg3[%c0_5, %c0_6, %c0_7] : memref<1x1x128xf32, #tpu.memory_space<vmem>>, vector<1x1x128xf32>
    tpu.vector_store %arg3[%c0_5, %c0_6, %c0_7], %8 {strides = array<i32>} : memref<1x1x128xf32, #tpu.memory_space<vmem>>, vector<1x1x128xf32>,
    return
  }
  func.func @transform_0(%arg0: i32) -> (i32, i32) {
    %c0_i32 = arith.constant 0 : i32
    %c0_i32_0 = arith.constant 0 : i32
    return %arg0, %c0_i32 : i32, i32
  }
  func.func @transform_1(%arg0: i32) -> (i32, i32, i32) {
    %c0_i32 = arith.constant 0 : i32
    %c0_i32_0 = arith.constant 0 : i32
    %c0_i32_1 = arith.constant 0 : i32
    return %arg0, %c0_i32, %c0_i32_0 : i32, i32, i32
  }
  func.func @transform_2(%arg0: i32) -> (i32, i32, i32) {
    %c0_i32 = arith.constant 0 : i32
    %c0_i32_0 = arith.constant 0 : i32
    %c0_i32_1 = arith.constant 0 : i32
    return %arg0, %c0_i32, %c0_i32_0 : i32, i32, i32
  }
}

module attributes {stable_mosaic.version = 11 : i64} {
  func.func @_apply_kernel(%arg0: i32, %arg1: memref<4x128xf32, #tpu.memory_space<vmem>>, %arg2: memref<1x128xf32, #tpu.memory_space<vmem>>, %arg3: memref<1x128xf32, #tpu.memory_space<vmem>>, %arg4: memref<4x128xf32, #tpu.memory_space<vmem>>) attributes {dimension_semantics = [#tpu.dimension_semantics<parallel>], iteration_bounds = array<i64: 1>, scalar_prefetch = 0 : i64, scratch_operands = 0 : i64, tpu.core_type = #tpu.core_type<tc>, window_params = [{transform_indices = @transform_0, window_bounds = array<i64: 4, 128>}, {pipeline_mode = #tpu.pipeline_mode<synchronous>, transform_indices = @transform_1, window_bounds = array<i64: 1, 128>}, {pipeline_mode = #tpu.pipeline_mode<synchronous>, transform_indices = @transform_2, window_bounds = array<i64: 1, 128>}, {transform_indices = @transform_3, window_bounds = array<i64: 4, 128>}]} {
    %c0 = arith.constant 0 : index
    %c0_0 = arith.constant 0 : index
    %0 = vector.load %arg1[%c0, %c0_0] : memref<4x128xf32, #tpu.memory_space<vmem>>, vector<4x128xf32>
    %c0_1 = arith.constant 0 : index
    %c0_2 = arith.constant 0 : index
    %1 = vector.load %arg2[%c0_1, %c0_2] : memref<1x128xf32, #tpu.memory_space<vmem>>, vector<1x128xf32>
    %2 = vector.broadcast %1 : vector<1x128xf32> to vector<4x128xf32>
    %3 = arith.mulf %0, %2 : vector<4x128xf32>
    %c0_3 = arith.constant 0 : index
    %c0_4 = arith.constant 0 : index
    %4 = vector.load %arg3[%c0_3, %c0_4] : memref<1x128xf32, #tpu.memory_space<vmem>>, vector<1x128xf32>
    %5 = vector.broadcast %4 : vector<1x128xf32> to vector<4x128xf32>
    %6 = arith.addf %3, %5 : vector<4x128xf32>
    %c0_5 = arith.constant 0 : index
    %c0_6 = arith.constant 0 : index
    %7 = vector.load %arg4[%c0_5, %c0_6] : memref<4x128xf32, #tpu.memory_space<vmem>>, vector<4x128xf32>
    tpu.vector_store %arg4[%c0_5, %c0_6], %6 {strides = array<i32>} : memref<4x128xf32, #tpu.memory_space<vmem>>, vector<4x128xf32>,
    return
  }
  func.func @transform_0(%arg0: i32) -> (i32, i32) {
    %c0_i32 = arith.constant 0 : i32
    %c0_i32_0 = arith.constant 0 : i32
    return %arg0, %c0_i32 : i32, i32
  }
  func.func @transform_1(%arg0: i32) -> (i32, i32) {
    %c0_i32 = arith.constant 0 : i32
    %c0_i32_0 = arith.constant 0 : i32
    %c0_i32_1 = arith.constant 0 : i32
    return %c0_i32, %c0_i32_0 : i32, i32
  }
  func.func @transform_2(%arg0: i32) -> (i32, i32) {
    %c0_i32 = arith.constant 0 : i32
    %c0_i32_0 = arith.constant 0 : i32
    %c0_i32_1 = arith.constant 0 : i32
    return %c0_i32, %c0_i32_0 : i32, i32
  }
  func.func @transform_3(%arg0: i32) -> (i32, i32) {
    %c0_i32 = arith.constant 0 : i32
    %c0_i32_0 = arith.constant 0 : i32
    return %arg0, %c0_i32 : i32, i32
  }
}

</mosaic_0001>

<llo_original>
// kernel: sequence_wise_batch_norm.2
$region0: #{sequence_wise_batch_norm.2}
  #allocation0 [shape = 'u32[]', space=smem, size = 0x4, offset = 0x4, fixed_abs, tag = 'smem constant byte address 0x4 - core index']
  #allocation1 [shape = 'u32[144,128]{1,0:T(1,128)}', space=vmem, size = 0x12000, scoped, tag = 'internal scratch']
  %s0 = inlined_call_operand.vmem [shape: f32[4,128], index: 0, kind: input, shape index: {}]
  %s1 = inlined_call_operand.vmem [shape: f32[1,1,128], index: 1, kind: output, shape index: {0}]
  %s2 = inlined_call_operand.vmem [shape: f32[1,1,128], index: 2, kind: output, shape index: {1}]
  %3 = xla_tuple %s1, %s2
  %s4 = sld [smem:[#allocation0]]
  $region22: #{sequence_wise_batch_norm.2} parent=0
    _
  %s6 = ssub.s32 1, %s4
  %s7 = scalar_select 0, %s6, %s4
  // Predicated region
  $region2: #{sequence_wise_batch_norm.2} parent=0 // pred_check
    _
  $region3: #{sequence_wise_batch_norm.2} parent=0 // pred_check_branch
    %9 = sbr.rel (0) target = $region5
  $region4: #{sequence_wise_batch_norm.2} parent=0 // pred_region
    _
  $region5: #{sequence_wise_batch_norm.2} parent=0 // pred_fallthru
    _
  %v10 = vld [vmem:[%s0] sm:$0xf]
  %vm11 = vcmask 1043456
  %v12 = vsel %vm11, %v10, 0.0
  %v13 = vrot.slane %v12, 4
  %v14 = vadd.f32 %v12, %v13
  %v15 = vrot.slane %v14, 2
  %v16 = vadd.f32 %v14, %v15
  %v17 = vrot.slane %v16, 1
  %v18 = vadd.f32 %v16, %v17
  %19 = vst [vmem:[%s1] sm:$0x1] %v18
  %v20 = vmul.f32 %v10, %v10
  %v21 = vsel %vm11, %v20, 0.0
  %v22 = vrot.slane %v21, 4
  %v23 = vadd.f32 %v21, %v22
  %v24 = vrot.slane %v23, 2
  %v25 = vadd.f32 %v23, %v24
  %v26 = vrot.slane %v25, 1
  %v27 = vadd.f32 %v25, %v26
  %28 = vst [vmem:[%s2] sm:$0x1] %v27
  // Predicated region
  $region6: #{sequence_wise_batch_norm.2} parent=0 // pred_check
    _
  $region7: #{sequence_wise_batch_norm.2} parent=0 // pred_check_branch
    %30 = sbr.rel (0) target = $region9
  $region8: #{sequence_wise_batch_norm.2} parent=0 // pred_region
    _
  $region9: #{sequence_wise_batch_norm.2} parent=0 // pred_fallthru
    _
  // Predicated region
  $region10: #{sequence_wise_batch_norm.2} parent=0 // pred_check
    _
  $region11: #{sequence_wise_batch_norm.2} parent=0 // pred_check_branch
    %32 = sbr.rel (0) target = $region13
  $region12: #{sequence_wise_batch_norm.2} parent=0 // pred_region
    _
  $region13: #{sequence_wise_batch_norm.2} parent=0 // pred_fallthru
    _
  // Predicated region
  $region14: #{sequence_wise_batch_norm.2} parent=0 // pred_check
    _
  $region15: #{sequence_wise_batch_norm.2} parent=0 // pred_check_branch
    %34 = sbr.rel (0) target = $region17
  $region16: #{sequence_wise_batch_norm.2} parent=0 // pred_region
    _
  $region17: #{sequence_wise_batch_norm.2} parent=0 // pred_fallthru
    _
  // Predicated region
  $region18: #{sequence_wise_batch_norm.2} parent=0 // pred_check
    _
  $region19: #{sequence_wise_batch_norm.2} parent=0 // pred_check_branch
    %36 = sbr.rel (0) target = $region21
  $region20: #{sequence_wise_batch_norm.2} parent=0 // pred_region
    _
  $region21: #{sequence_wise_batch_norm.2} parent=0 // pred_fallthru
    _

// kernel: sequence_wise_batch_norm.3
$region0: #{sequence_wise_batch_norm.3}
  #allocation0 [shape = 'u32[]', space=smem, size = 0x4, offset = 0x4, fixed_abs, tag = 'smem constant byte address 0x4 - core index']
  #allocation1 [shape = 'u32[144,128]{1,0:T(1,128)}', space=vmem, size = 0x12000, scoped, tag = 'internal scratch']
  %s0 = inlined_call_operand.vmem [shape: f32[4,128], index: 0, kind: input, shape index: {}]
  %s1 = inlined_call_operand.vmem [shape: f32[1,128], index: 1, kind: input, shape index: {}]
  %s2 = inlined_call_operand.vmem [shape: f32[1,128], index: 2, kind: input, shape index: {}]
  %s3 = inlined_call_operand.vmem [shape: f32[4,128], index: 3, kind: output, shape index: {}]
  %s4 = sld [smem:[#allocation0]]
  $region22: #{sequence_wise_batch_norm.3} parent=0
    _
  %s6 = ssub.s32 1, %s4
  %s7 = scalar_select 0, %s6, %s4
  // Predicated region
  $region2: #{sequence_wise_batch_norm.3} parent=0 // pred_check
    _
  $region3: #{sequence_wise_batch_norm.3} parent=0 // pred_check_branch
    %9 = sbr.rel (0) target = $region5
  $region4: #{sequence_wise_batch_norm.3} parent=0 // pred_region
    _
  $region5: #{sequence_wise_batch_norm.3} parent=0 // pred_fallthru
    _
  // Predicated region
  $region6: #{sequence_wise_batch_norm.3} parent=0 // pred_check
    _
  $region7: #{sequence_wise_batch_norm.3} parent=0 // pred_check_branch
    %11 = sbr.rel (0) target = $region9
  $region8: #{sequence_wise_batch_norm.3} parent=0 // pred_region
    _
  $region9: #{sequence_wise_batch_norm.3} parent=0 // pred_fallthru
    _
  // Predicated region
  $region10: #{sequence_wise_batch_norm.3} parent=0 // pred_check
    _
  $region11: #{sequence_wise_batch_norm.3} parent=0 // pred_check_branch
    %13 = sbr.rel (0) target = $region13
  $region12: #{sequence_wise_batch_norm.3} parent=0 // pred_region
    _
  $region13: #{sequence_wise_batch_norm.3} parent=0 // pred_fallthru
    _
  %v14 = vld [vmem:[%s0] sm:$0xf]
  %v15 = vld [vmem:[%s1] sm:$0x1]
  %v17 = vlaneseq
  %v18 = vshrl.u32 %v17, 7
  %v19 = vsub.s32 0, %v18
  %v20 = vrot.slane %v15, %v19
  %v22 = vmul.f32 %v14, %v20
  %v23 = vld [vmem:[%s2] sm:$0x1]
  %v25 = vlaneseq
  %v26 = vshrl.u32 %v25, 7
  %v27 = vsub.s32 0, %v26
  %v28 = vrot.slane %v23, %v27
  %v30 = vadd.f32 %v22, %v28
  %31 = vst [vmem:[%s3] sm:$0xf] %v30
  // Predicated region
  $region14: #{sequence_wise_batch_norm.3} parent=0 // pred_check
    _
  $region15: #{sequence_wise_batch_norm.3} parent=0 // pred_check_branch
    %33 = sbr.rel (0) target = $region17
  $region16: #{sequence_wise_batch_norm.3} parent=0 // pred_region
    _
  $region17: #{sequence_wise_batch_norm.3} parent=0 // pred_fallthru
    _
  // Predicated region
  $region18: #{sequence_wise_batch_norm.3} parent=0 // pred_check
    _
  $region19: #{sequence_wise_batch_norm.3} parent=0 // pred_check_branch
    %35 = sbr.rel (0) target = $region21
  $region20: #{sequence_wise_batch_norm.3} parent=0 // pred_region
    _
  $region21: #{sequence_wise_batch_norm.3} parent=0 // pred_fallthru
    _

</llo_original>
